<compile_context>
chip_gen: v6e
topology: v6e:2x2x1
jax: 0.10.0
libtpu: 0.0.40
codegen_flags: <defaults>
</compile_context>

<pallas_src>
import functools

import jax
import jax.numpy as jnp
from jax.experimental import pallas as pl
from jax.experimental.pallas import tpu as pltpu

_LANE = 128
_SUBLANE = 8


def _round_up(x, m):
    return (x + m - 1) // m * m


def _temporal_output_kernel(x_ref, w1_ref, b1_ref, w2_ref, b2_ref, o_ref, h_ref):
    # First Linear: (TM, d_model) @ (d_model, d_model) + (1, d_model)
    h_ref[...] = (
        jnp.dot(x_ref[...], w1_ref[...], preferred_element_type=jnp.float32)
        + b1_ref[...].astype(jnp.float32)
    )
    # Second Linear: (TM, d_model) @ (d_model, out_pad) + (1, out_pad)
    y = (
        jnp.dot(h_ref[...].astype(w2_ref.dtype), w2_ref[...],
                preferred_element_type=jnp.float32)
        + b2_ref[...].astype(jnp.float32)
    )
    o_ref[...] = y.astype(o_ref.dtype)


@functools.partial(jax.jit, static_argnames=("block_rows",))
def temporal_output_forward(val, w1, b1, w2, b2, *, block_rows=512):
    """Forward pass of TemporalOutput.

    val: (B, S, d_model)
    w1:  (d_model, d_model)   b1: (1, d_model) or (d_model,)
    w2:  (d_model, out_dim)   b2: (1, out_dim) or (out_dim,)
    returns (B, S, out_dim)
    """
    B, S, d_model = val.shape
    out_dim = w2.shape[-1]
    N = B * S
    x = val.reshape(N, d_model)

    # Row tile: sublane-aligned, no larger than the (padded) row count.
    TM = min(block_rows, _round_up(N, _SUBLANE))
    N_pad = _round_up(N, TM)
    if N_pad != N:
        x = jnp.pad(x, ((0, N_pad - N), (0, 0)))

    # Lane-dense output: pad out_dim up to a multiple of 128.
    out_pad = _round_up(max(out_dim, _LANE), _LANE)
    b1_2d = b1.reshape(1, d_model)
    b2_2d = b2.reshape(1, out_dim)
    if out_pad != out_dim:
        w2p = jnp.pad(w2, ((0, 0), (0, out_pad - out_dim)))
        b2p = jnp.pad(b2_2d, ((0, 0), (0, out_pad - out_dim)))
    else:
        w2p, b2p = w2, b2_2d

    grid = (pl.cdiv(N_pad, TM),)

    itemsize = jnp.dtype(val.dtype).itemsize
    flops = 2 * N_pad * d_model * (d_model + out_pad)
    bytes_accessed = (
        N_pad * d_model * itemsize                      # x
        + d_model * d_model * itemsize                  # w1
        + d_model * out_pad * itemsize                  # w2 (padded)
        + (d_model + out_pad) * itemsize                # biases
        + N_pad * out_pad * itemsize                    # output
    )
    cost = pl.CostEstimate(
        flops=flops, transcendentals=0, bytes_accessed=bytes_accessed
    )

    y = pl.pallas_call(
        _temporal_output_kernel,
        out_shape=jax.ShapeDtypeStruct((N_pad, out_pad), val.dtype),
        grid_spec=pltpu.PrefetchScalarGridSpec(
            num_scalar_prefetch=0,
            grid=grid,
            in_specs=[
                pl.BlockSpec((TM, d_model), lambda i: (i, 0)),        # x tile
                pl.BlockSpec((d_model, d_model), lambda i: (0, 0)),   # w1 resident
                pl.BlockSpec((1, d_model), lambda i: (0, 0)),         # b1 resident
                pl.BlockSpec((d_model, out_pad), lambda i: (0, 0)),   # w2 resident
                pl.BlockSpec((1, out_pad), lambda i: (0, 0)),         # b2 resident
            ],
            out_specs=pl.BlockSpec((TM, out_pad), lambda i: (i, 0)),
            scratch_shapes=[pltpu.VMEM((TM, d_model), jnp.float32)],
        ),
        compiler_params=pltpu.CompilerParams(
            dimension_semantics=("parallel",),
            # Comfortably above the 16/32 MiB scoped default, under v7x's
            # 64 MiB physical VMEM.
            vmem_limit_bytes=48 * 1024 * 1024,
        ),
        cost_estimate=cost,
    )(x, w1, b1_2d, w2p, b2p)

    return y[:N, :out_dim].reshape(B, S, out_dim)


def make_params(key, d_model, out_dim, dtype=jnp.float32):
    """Deterministic synthetic parameters (PyTorch Linear shapes, pre-transposed)."""
    k1, k2, k3, k4 = jax.random.split(key, 4)
    # PyTorch nn.Linear(d_model, d_model): weight (d_model, d_model), bias (d_model,)
    # stored here as (in, out) so the kernel does x @ W.
    scale1 = 1.0 / jnp.sqrt(d_model)
    w1 = jax.random.uniform(k1, (d_model, d_model), dtype, -scale1, scale1)
    b1 = jax.random.uniform(k2, (1, d_model), dtype, -scale1, scale1)
    # PyTorch nn.Linear(d_model, out_dim)
    w2 = jax.random.uniform(k3, (d_model, out_dim), dtype, -scale1, scale1)
    b2 = jax.random.uniform(k4, (1, out_dim), dtype, -scale1, scale1)
    return w1, b1, w2, b2


if __name__ == "__main__":
    key = jax.random.PRNGKey(0)
    kx, kp_scaling, kp_embed = jax.random.split(key, 3)

    B, S, d_model = 2, 8, 32
    val = jax.random.normal(kx, (B, S, d_model), jnp.float32)

    # Case 1: col in scaling_cols -> Linear(d_model, d_model) + Linear(d_model, 1)
    w1, b1, w2, b2 = make_params(kp_scaling, d_model, out_dim=1)
    out_scaling = temporal_output_forward(val, w1, b1, w2, b2)
    jax.block_until_ready(out_scaling)
    ref_scaling = (val.reshape(-1, d_model) @ w1 + b1) @ w2 + b2
    ref_scaling = ref_scaling.reshape(B, S, 1)
    assert out_scaling.shape == (B, S, 1)
    assert jnp.allclose(out_scaling, ref_scaling, atol=1e-5, rtol=1e-5)

    # Case 2: col in embedding_cols -> Linear(d_model, d_model) + Linear(d_model, num_cls)
    num_cls = 16
    w1e, b1e, w2e, b2e = make_params(kp_embed, d_model, out_dim=num_cls)
    out_embed = temporal_output_forward(val, w1e, b1e, w2e, b2e)
    jax.block_until_ready(out_embed)
    ref_embed = (val.reshape(-1, d_model) @ w1e + b1e) @ w2e + b2e
    ref_embed = ref_embed.reshape(B, S, num_cls)
    assert out_embed.shape == (B, S, num_cls)
    assert jnp.allclose(out_embed, ref_embed, atol=1e-5, rtol=1e-5)

    print("KERNEL_OK")
</pallas_src>

<mosaic_0001>
module attributes {stable_mosaic.version = 11 : i64} {
  func.func @_temporal_output_kernel(%arg0: i32, %arg1: memref<16x32xf32, #tpu.memory_space<vmem>>, %arg2: memref<32x32xf32, #tpu.memory_space<vmem>>, %arg3: memref<1x32xf32, #tpu.memory_space<vmem>>, %arg4: memref<32x128xf32, #tpu.memory_space<vmem>>, %arg5: memref<1x128xf32, #tpu.memory_space<vmem>>, %arg6: memref<16x128xf32, #tpu.memory_space<vmem>>, %arg7: memref<16x32xf32, #tpu.memory_space<vmem>>) attributes {dimension_semantics = [#tpu.dimension_semantics<parallel>], iteration_bounds = array<i64: 1>, scalar_prefetch = 0 : i64, scratch_operands = 1 : i64, tpu.core_type = #tpu.core_type<tc>, window_params = [{transform_indices = @transform_0, window_bounds = array<i64: 16, 32>}, {pipeline_mode = #tpu.pipeline_mode<synchronous>, transform_indices = @transform_1, window_bounds = array<i64: 32, 32>}, {pipeline_mode = #tpu.pipeline_mode<synchronous>, transform_indices = @transform_2, window_bounds = array<i64: 1, 32>}, {pipeline_mode = #tpu.pipeline_mode<synchronous>, transform_indices = @transform_3, window_bounds = array<i64: 32, 128>}, {pipeline_mode = #tpu.pipeline_mode<synchronous>, transform_indices = @transform_4, window_bounds = array<i64: 1, 128>}, {transform_indices = @transform_5, window_bounds = array<i64: 16, 128>}]} {
    %c0 = arith.constant 0 : index
    %c0_0 = arith.constant 0 : index
    %0 = vector.load %arg1[%c0, %c0_0] : memref<16x32xf32, #tpu.memory_space<vmem>>, vector<16x32xf32>
    %c0_1 = arith.constant 0 : index
    %c0_2 = arith.constant 0 : index
    %1 = vector.load %arg2[%c0_1, %c0_2] : memref<32x32xf32, #tpu.memory_space<vmem>>, vector<32x32xf32>
    %cst = arith.constant dense<0.000000e+00> : vector<16x32xf32>
    %2 = tpu.matmul %0, %1, %cst {dimension_numbers = #tpu.dot_dimension_numbers<[1], [0], [0], [1], [0, 0, 1, 1], [], []>} : vector<16x32xf32>, vector<32x32xf32>, vector<16x32xf32> -> vector<16x32xf32>
    %c0_3 = arith.constant 0 : index
    %c0_4 = arith.constant 0 : index
    %3 = vector.load %arg3[%c0_3, %c0_4] : memref<1x32xf32, #tpu.memory_space<vmem>>, vector<1x32xf32>
    %4 = vector.broadcast %3 : vector<1x32xf32> to vector<16x32xf32>
    %5 = arith.addf %2, %4 : vector<16x32xf32>
    %c0_5 = arith.constant 0 : index
    %c0_6 = arith.constant 0 : index
    %6 = vector.load %arg7[%c0_5, %c0_6] : memref<16x32xf32, #tpu.memory_space<vmem>>, vector<16x32xf32>
    tpu.vector_store %arg7[%c0_5, %c0_6], %5 {strides = array<i32>} : memref<16x32xf32, #tpu.memory_space<vmem>>, vector<16x32xf32>,
    %c0_7 = arith.constant 0 : index
    %c0_8 = arith.constant 0 : index
    %7 = vector.load %arg7[%c0_7, %c0_8] : memref<16x32xf32, #tpu.memory_space<vmem>>, vector<16x32xf32>
    %c0_9 = arith.constant 0 : index
    %c0_10 = arith.constant 0 : index
    %8 = vector.load %arg4[%c0_9, %c0_10] : memref<32x128xf32, #tpu.memory_space<vmem>>, vector<32x128xf32>
    %cst_11 = arith.constant dense<0.000000e+00> : vector<16x128xf32>
    %9 = tpu.matmul %7, %8, %cst_11 {dimension_numbers = #tpu.dot_dimension_numbers<[1], [0], [0], [1], [0, 0, 1, 1], [], []>} : vector<16x32xf32>, vector<32x128xf32>, vector<16x128xf32> -> vector<16x128xf32>
    %c0_12 = arith.constant 0 : index
    %c0_13 = arith.constant 0 : index
    %10 = vector.load %arg5[%c0_12, %c0_13] : memref<1x128xf32, #tpu.memory_space<vmem>>, vector<1x128xf32>
    %11 = vector.broadcast %10 : vector<1x128xf32> to vector<16x128xf32>
    %12 = arith.addf %9, %11 : vector<16x128xf32>
    %c0_14 = arith.constant 0 : index
    %c0_15 = arith.constant 0 : index
    %13 = vector.load %arg6[%c0_14, %c0_15] : memref<16x128xf32, #tpu.memory_space<vmem>>, vector<16x128xf32>
    tpu.vector_store %arg6[%c0_14, %c0_15], %12 {strides = array<i32>} : memref<16x128xf32, #tpu.memory_space<vmem>>, vector<16x128xf32>,
    return
  }
  func.func @transform_0(%arg0: i32) -> (i32, i32) {
    %c0_i32 = arith.constant 0 : i32
    %c0_i32_0 = arith.constant 0 : i32
    return %arg0, %c0_i32 : i32, i32
  }
  func.func @transform_1(%arg0: i32) -> (i32, i32) {
    %c0_i32 = arith.constant 0 : i32
    %c0_i32_0 = arith.constant 0 : i32
    %c0_i32_1 = arith.constant 0 : i32
    return %c0_i32, %c0_i32_0 : i32, i32
  }
  func.func @transform_2(%arg0: i32) -> (i32, i32) {
    %c0_i32 = arith.constant 0 : i32
    %c0_i32_0 = arith.constant 0 : i32
    %c0_i32_1 = arith.constant 0 : i32
    return %c0_i32, %c0_i32_0 : i32, i32
  }
  func.func @transform_3(%arg0: i32) -> (i32, i32) {
    %c0_i32 = arith.constant 0 : i32
    %c0_i32_0 = arith.constant 0 : i32
    %c0_i32_1 = arith.constant 0 : i32
    return %c0_i32, %c0_i32_0 : i32, i32
  }
  func.func @transform_4(%arg0: i32) -> (i32, i32) {
    %c0_i32 = arith.constant 0 : i32
    %c0_i32_0 = arith.constant 0 : i32
    %c0_i32_1 = arith.constant 0 : i32
    return %c0_i32, %c0_i32_0 : i32, i32
  }
  func.func @transform_5(%arg0: i32) -> (i32, i32) {
    %c0_i32 = arith.constant 0 : i32
    %c0_i32_0 = arith.constant 0 : i32
    return %arg0, %c0_i32 : i32, i32
  }
}

</mosaic_0001>

<llo_original>
// kernel: temporal_output_forward.1
$region0: #{temporal_output_forward.1}
  #allocation0 [shape = 'u32[]', space=smem, size = 0x4, offset = 0x4, fixed_abs, tag = 'smem constant byte address 0x4 - core index']
  #allocation1 [shape = 'u32[144,128]{1,0:T(1,128)}', space=vmem, size = 0x12000, scoped, tag = 'internal scratch']
  #allocation2 [shape = 'f32[16,32]{1,0:T(8,128)}', space=vmem, size = 0x2000, scoped, tag = 'scratch operand']
  %s0 = inlined_call_operand.vmem [shape: f32[16,32], index: 0, kind: input, shape index: {}]
  %s1 = inlined_call_operand.vmem [shape: f32[32,32], index: 1, kind: input, shape index: {}]
  %s2 = inlined_call_operand.vmem [shape: f32[1,32], index: 2, kind: input, shape index: {}]
  %s3 = inlined_call_operand.vmem [shape: f32[32,128], index: 3, kind: input, shape index: {}]
  %s4 = inlined_call_operand.vmem [shape: f32[1,128], index: 4, kind: input, shape index: {}]
  %s5 = inlined_call_operand.vmem [shape: f32[16,128], index: 5, kind: output, shape index: {}]
  %s6 = sld [smem:[#allocation0]]
  $region30: #{temporal_output_forward.1} parent=0
    _
  %s8 = ssub.s32 1, %s6
  %s9 = scalar_select 0, %s8, %s6
  // Predicated region
  $region2: #{temporal_output_forward.1} parent=0 // pred_check
    _
  $region3: #{temporal_output_forward.1} parent=0 // pred_check_branch
    %11 = sbr.rel (0) target = $region5
  $region4: #{temporal_output_forward.1} parent=0 // pred_region
    _
  $region5: #{temporal_output_forward.1} parent=0 // pred_fallthru
    _
  // Predicated region
  $region6: #{temporal_output_forward.1} parent=0 // pred_check
    _
  $region7: #{temporal_output_forward.1} parent=0 // pred_check_branch
    %13 = sbr.rel (0) target = $region9
  $region8: #{temporal_output_forward.1} parent=0 // pred_region
    _
  $region9: #{temporal_output_forward.1} parent=0 // pred_fallthru
    _
  // Predicated region
  $region10: #{temporal_output_forward.1} parent=0 // pred_check
    _
  $region11: #{temporal_output_forward.1} parent=0 // pred_check_branch
    %15 = sbr.rel (0) target = $region13
  $region12: #{temporal_output_forward.1} parent=0 // pred_region
    _
  $region13: #{temporal_output_forward.1} parent=0 // pred_fallthru
    _
  // Predicated region
  $region14: #{temporal_output_forward.1} parent=0 // pred_check
    _
  $region15: #{temporal_output_forward.1} parent=0 // pred_check_branch
    %17 = sbr.rel (0) target = $region17
  $region16: #{temporal_output_forward.1} parent=0 // pred_region
    _
  $region17: #{temporal_output_forward.1} parent=0 // pred_fallthru
    _
  // Predicated region
  $region18: #{temporal_output_forward.1} parent=0 // pred_check
    _
  $region19: #{temporal_output_forward.1} parent=0 // pred_check_branch
    %19 = sbr.rel (0) target = $region21
  $region20: #{temporal_output_forward.1} parent=0 // pred_region
    _
  $region21: #{temporal_output_forward.1} parent=0 // pred_fallthru
    _
  %v20 = vld [vmem:[%s0] sm:$0xff]
  %v21 = vld [vmem:[%s0 + $0x8] sm:$0xff]
  %v22 = vld [vmem:[%s1] sm:$0xff]
  %v23 = vld [vmem:[%s1 + $0x8] sm:$0xff]
  %v24 = vld [vmem:[%s1 + $0x10] sm:$0xff]
  %v25 = vld [vmem:[%s1 + $0x18] sm:$0xff]
  %v26 = vld [vmem:[%s2] sm:$0x1]
  %v28 = vlaneseq
  %v29 = vshrl.u32 %v28, 7
  %v30 = vsub.s32 0, %v29
  %v31 = vrot.slane %v26, %v30
  %vm33 = vcmask 261120
  %v35 = vsel %vm33, %v20, 0
  %v38 = vsel %vm33, %v21, 0
  %40 = vmatprep.subr.mxu0 0.0
  %41 = vmatpush1.msra.mxu0 0.0
  %42 = vmatprep.subr.mxu0 0.0
  %43 = vmatpush1.msra.mxu0 0.0
  %44 = vmatprep.subr.mxu0 0.0
  %45 = vmatpush1.msra.mxu0 0.0
  %46 = vmatprep.subr.mxu0 0.0
  %47 = vmatpush1.msra.mxu0 0.0
  %48 = vmatprep.subr.mxu0 0.0
  %49 = vmatpush1.msra.mxu0 0.0
  %50 = vmatprep.subr.mxu0 0.0
  %51 = vmatpush1.msra.mxu0 0.0
  %52 = vmatprep.subr.mxu0 0.0
  %53 = vmatpush1.msra.mxu0 0.0
  %54 = vmatprep.subr.mxu0 0.0
  %55 = vmatpush1.msra.mxu0 0.0
  %56 = vmatprep.subr.mxu0 0.0
  %57 = vmatpush1.msra.mxu0 0.0
  %58 = vmatprep.subr.mxu0 0.0
  %59 = vmatpush1.msra.mxu0 0.0
  %60 = vmatprep.subr.mxu0 0.0
  %61 = vmatpush1.msra.mxu0 0.0
  %62 = vmatprep.subr.mxu0 0.0
  %63 = vmatpush1.msra.mxu0 0.0
  %64 = vmatprep.subr.mxu0 0.0
  %65 = vmatpush1.msra.mxu0 %v25
  %66 = vmatprep.subr.mxu0 0.0
  %67 = vmatpush1.msra.mxu0 %v24
  %68 = vmatprep.subr.mxu0 0.0
  %69 = vmatpush1.msra.mxu0 %v23
  %70 = vmatprep.subr.mxu0 0.0
  %71 = vmatpush1.msra.mxu0 %v22
  %72 = vmatprep.subr.mxu0 0.0
  %73 = vmatpush2.msra.mxu0 0.0
  %74 = vmatprep.subr.mxu0 0.0
  %75 = vmatpush2.msra.mxu0 0.0
  %76 = vmatprep.subr.mxu0 0.0
  %77 = vmatpush2.msra.mxu0 0.0
  %78 = vmatprep.subr.mxu0 0.0
  %79 = vmatpush2.msra.mxu0 0.0
  %80 = vmatprep.subr.mxu0 0.0
  %81 = vmatpush2.msra.mxu0 0.0
  %82 = vmatprep.subr.mxu0 0.0
  %83 = vmatpush2.msra.mxu0 0.0
  %84 = vmatprep.subr.mxu0 0.0
  %85 = vmatpush2.msra.mxu0 0.0
  %86 = vmatprep.subr.mxu0 0.0
  %87 = vmatpush2.msra.mxu0 0.0
  %88 = vmatprep.subr.mxu0 0.0
  %89 = vmatpush2.msra.mxu0 0.0
  %90 = vmatprep.subr.mxu0 0.0
  %91 = vmatpush2.msra.mxu0 0.0
  %92 = vmatprep.subr.mxu0 0.0
  %93 = vmatpush2.msra.mxu0 0.0
  %94 = vmatprep.subr.mxu0 0.0
  %95 = vmatpush2.msra.mxu0 0.0
  %96 = vmatprep.subr.mxu0 0.0
  %97 = vmatpush2.msra.mxu0 0.0
  %98 = vmatprep.subr.mxu0 0.0
  %99 = vmatpush2.msra.mxu0 0.0
  %100 = vmatprep.subr.mxu0 0.0
  %101 = vmatpush2.msra.mxu0 0.0
  %102 = vmatprep.subr.mxu0 0.0
  %103 = vmatpush2.msra.mxu0 0.0
  %104 = vmatprep.mubr.f32.mxu0 0.0
  %105 = vmatmul.mubr.f32.gmra.mxu0 %v35
  %v106 = vpop.f32.mrf.mxu0
  %v107 = vadd.f32 %v31, %v106
  %v108 = vpop.f32.mrf.mxu0
  %109 = vmatprep.mubr.f32.mxu0 0.0
  %110 = vmatmul.mubr.f32.gmra.mxu0 %v38
  %v111 = vpop.f32.mrf.mxu0
  %v112 = vadd.f32 %v31, %v111
  %v113 = vpop.f32.mrf.mxu0
  %114 = vdwg.mxu0
  %115 = vst.msk [vmem:[#allocation2] sm:$0xff] %vm33, %v107
  %116 = vst.msk [vmem:[#allocation2 + $0x8] sm:$0xff] %vm33, %v112
  %v117 = vld [vmem:[#allocation2] sm:$0xff]
  %v118 = vld [vmem:[#allocation2 + $0x8] sm:$0xff]
  %v119 = vld [vmem:[%s3] sm:$0xff]
  %v120 = vld [vmem:[%s3 + $0x8] sm:$0xff]
  %v121 = vld [vmem:[%s3 + $0x10] sm:$0xff]
  %v122 = vld [vmem:[%s3 + $0x18] sm:$0xff]
  %v123 = vld [vmem:[%s4] sm:$0x1]
  %v125 = vlaneseq
  %v126 = vshrl.u32 %v125, 7
  %v127 = vsub.s32 0, %v126
  %v128 = vrot.slane %v123, %v127
  %v131 = vsel %vm33, %v117, 0
  %v134 = vsel %vm33, %v118, 0
  %136 = vmatprep.subr.mxu0 0.0
  %137 = vmatpush1.msra.mxu0 0.0
  %138 = vmatprep.subr.mxu0 0.0
  %139 = vmatpush1.msra.mxu0 0.0
  %140 = vmatprep.subr.mxu0 0.0
  %141 = vmatpush1.msra.mxu0 0.0
  %142 = vmatprep.subr.mxu0 0.0
  %143 = vmatpush1.msra.mxu0 0.0
  %144 = vmatprep.subr.mxu0 0.0
  %145 = vmatpush1.msra.mxu0 0.0
  %146 = vmatprep.subr.mxu0 0.0
  %147 = vmatpush1.msra.mxu0 0.0
  %148 = vmatprep.subr.mxu0 0.0
  %149 = vmatpush1.msra.mxu0 0.0
  %150 = vmatprep.subr.mxu0 0.0
  %151 = vmatpush1.msra.mxu0 0.0
  %152 = vmatprep.subr.mxu0 0.0
  %153 = vmatpush1.msra.mxu0 0.0
  %154 = vmatprep.subr.mxu0 0.0
  %155 = vmatpush1.msra.mxu0 0.0
  %156 = vmatprep.subr.mxu0 0.0
  %157 = vmatpush1.msra.mxu0 0.0
  %158 = vmatprep.subr.mxu0 0.0
  %159 = vmatpush1.msra.mxu0 0.0
  %160 = vmatprep.subr.mxu0 0.0
  %161 = vmatpush1.msra.mxu0 %v122
  %162 = vmatprep.subr.mxu0 0.0
  %163 = vmatpush1.msra.mxu0 %v121
  %164 = vmatprep.subr.mxu0 0.0
  %165 = vmatpush1.msra.mxu0 %v120
  %166 = vmatprep.subr.mxu0 0.0
  %167 = vmatpush1.msra.mxu0 %v119
  %168 = vmatprep.subr.mxu0 0.0
  %169 = vmatpush2.msra.mxu0 0.0
  %170 = vmatprep.subr.mxu0 0.0
  %171 = vmatpush2.msra.mxu0 0.0
  %172 = vmatprep.subr.mxu0 0.0
  %173 = vmatpush2.msra.mxu0 0.0
  %174 = vmatprep.subr.mxu0 0.0
  %175 = vmatpush2.msra.mxu0 0.0
  %176 = vmatprep.subr.mxu0 0.0
  %177 = vmatpush2.msra.mxu0 0.0
  %178 = vmatprep.subr.mxu0 0.0
  %179 = vmatpush2.msra.mxu0 0.0
  %180 = vmatprep.subr.mxu0 0.0
  %181 = vmatpush2.msra.mxu0 0.0
  %182 = vmatprep.subr.mxu0 0.0
  %183 = vmatpush2.msra.mxu0 0.0
  %184 = vmatprep.subr.mxu0 0.0
  %185 = vmatpush2.msra.mxu0 0.0
  %186 = vmatprep.subr.mxu0 0.0
  %187 = vmatpush2.msra.mxu0 0.0
  %188 = vmatprep.subr.mxu0 0.0
  %189 = vmatpush2.msra.mxu0 0.0
  %190 = vmatprep.subr.mxu0 0.0
  %191 = vmatpush2.msra.mxu0 0.0
  %192 = vmatprep.subr.mxu0 0.0
  %193 = vmatpush2.msra.mxu0 0.0
  %194 = vmatprep.subr.mxu0 0.0
  %195 = vmatpush2.msra.mxu0 0.0
  %196 = vmatprep.subr.mxu0 0.0
  %197 = vmatpush2.msra.mxu0 0.0
  %198 = vmatprep.subr.mxu0 0.0
  %199 = vmatpush2.msra.mxu0 0.0
  %200 = vmatprep.mubr.f32.mxu0 0.0
  %201 = vmatmul.mubr.f32.gmra.mxu0 %v131
  %v202 = vpop.f32.mrf.mxu0
  %v203 = vadd.f32 %v128, %v202
  %v204 = vpop.f32.mrf.mxu0
  %205 = vmatprep.mubr.f32.mxu0 0.0
  %206 = vmatmul.mubr.f32.gmra.mxu0 %v134
  %v207 = vpop.f32.mrf.mxu0
  %v208 = vadd.f32 %v128, %v207
  %v209 = vpop.f32.mrf.mxu0
  %210 = vdwg.mxu0
  %211 = vst [vmem:[%s5] sm:$0xff] %v203
  %212 = vst [vmem:[%s5 + $0x8] sm:$0xff] %v208
  // Predicated region
  $region22: #{temporal_output_forward.1} parent=0 // pred_check
    _
  $region23: #{temporal_output_forward.1} parent=0 // pred_check_branch
    %214 = sbr.rel (0) target = $region25
  $region24: #{temporal_output_forward.1} parent=0 // pred_region
    _
  $region25: #{temporal_output_forward.1} parent=0 // pred_fallthru
    _
  // Predicated region
  $region26: #{temporal_output_forward.1} parent=0 // pred_check
    _
  $region27: #{temporal_output_forward.1} parent=0 // pred_check_branch
    %216 = sbr.rel (0) target = $region29
  $region28: #{temporal_output_forward.1} parent=0 // pred_region
    _
  $region29: #{temporal_output_forward.1} parent=0 // pred_fallthru
    _

</llo_original>
